<compile_context>
chip_gen: v5e
topology: v5e:2x2
jax: 0.10.0
libtpu: 0.0.40
codegen_flags: <defaults>
</compile_context>

<pallas_src>
import jax
import jax.numpy as jnp
from jax.experimental import pallas as pl
from jax.experimental.pallas import tpu as pltpu

LANE_PAD = 128      # pad feature dims to a full lane tile -> lane-dense loads/stores
CLS_BLOCK_M = 512   # row-tile for the classifier kernel (multiple of 32 for int8 output)


def _round_up(x, m):
    return ((x + m - 1) // m) * m


# ----------------------------- Pallas kernels -----------------------------

def _gcn_all_steps_kernel(a_ref, x_ref, w1_ref, w2_ref, o_ref, h_ref):
    """All timesteps of the normal branch, fused in one invocation.

    x_ref/o_ref are [T*N, Fp] (flattened outside), a_ref is [T, N, N] (already
    degree-normalized).  Shared-weight matmuls are batched over all T*N rows;
    only the per-timestep A_t aggregations run in a static unrolled loop.
    """
    t, n, _ = a_ref.shape
    # Layer-1 weight matmul, batched across all timesteps (one big-M MXU pass).
    y1 = jnp.dot(x_ref[...], w1_ref[...], preferred_element_type=jnp.float32)   # [T*N, Fp]
    for tt in range(t):                                   # static unroll (T known at trace)
        h_ref[tt * n:(tt + 1) * n, :] = jnp.dot(
            a_ref[tt], y1[tt * n:(tt + 1) * n, :], preferred_element_type=jnp.float32)
    # Layer-2 weight matmul, batched across all timesteps.
    y2 = jnp.dot(h_ref[...], w2_ref[...], preferred_element_type=jnp.float32)   # [T*N, Fp]
    for tt in range(t):
        o_ref[tt * n:(tt + 1) * n, :] = jnp.dot(
            a_ref[tt], y2[tt * n:(tt + 1) * n, :], preferred_element_type=jnp.float32)


def _extrapolation_kernel(a1_ref, a2_ref, x_ref, rw_ref, rb_ref, w1_ref, w2_ref, o_ref):
    """Extrapolation branch fused: reshaper Linear -> gcn1(A_pred) -> gcn2(A_prev)."""
    x = jnp.dot(x_ref[...], rw_ref[...], preferred_element_type=jnp.float32) + rb_ref[...]
    h = jnp.dot(jnp.dot(a1_ref[...], x, preferred_element_type=jnp.float32),
                w1_ref[...], preferred_element_type=jnp.float32)
    o_ref[...] = jnp.dot(jnp.dot(a2_ref[...], h, preferred_element_type=jnp.float32),
                         w2_ref[...], preferred_element_type=jnp.float32)


def _cls_predict_kernel(x_ref, w1_ref, b1_ref, w2_ref, b2_ref, pred_ref):
    """Classifier MLP fused with the sigmoid+threshold epilogue on one row block.
    sigmoid(z) >= 0.5  <=>  z >= 0, so no transcendental is needed.  int8 output
    cuts the dominant HBM writeback 4x vs int32."""
    h = jnp.dot(x_ref[...], w1_ref[...], preferred_element_type=jnp.float32) + b1_ref[...]
    h = jnp.maximum(h, 0.0)                               # ReLU
    logits = jnp.dot(h, w2_ref[...], preferred_element_type=jnp.float32) + b2_ref[...]
    pred_ref[...] = (logits >= 0.0).astype(jnp.int8)


# ----------------------------- kernel wrappers -----------------------------

def _whole_spec(shape):
    # small operand: whole-array block resident in VMEM (grid=(1,))
    zeros = tuple(0 for _ in shape)
    return pl.BlockSpec(shape, lambda i, _z=zeros: _z)


def gcn_all_steps(a_hat_all, x_flat_pad, w1_pad, w2_pad):
    """All timesteps of the normal branch in ONE pallas_call (grid=(1,), all resident)."""
    t, n, _ = a_hat_all.shape
    tn, fp = x_flat_pad.shape
    return pl.pallas_call(
        _gcn_all_steps_kernel,
        out_shape=jax.ShapeDtypeStruct((tn, fp), jnp.float32),
        grid=(1,),
        in_specs=[
            _whole_spec((t, n, n)),
            _whole_spec((tn, fp)),
            _whole_spec((fp, fp)),
            _whole_spec((fp, fp)),
        ],
        out_specs=_whole_spec((tn, fp)),
        scratch_shapes=[pltpu.VMEM((tn, fp), jnp.float32)],
    )(a_hat_all, x_flat_pad, w1_pad, w2_pad)


def extrapolation_step(a_pred, a_prev, out_prev_pad, rw_pad, rb_pad, w1_pad, w2_pad):
    n = a_pred.shape[0]
    fp = out_prev_pad.shape[-1]
    return pl.pallas_call(
        _extrapolation_kernel,
        out_shape=jax.ShapeDtypeStruct((n, fp), jnp.float32),
        grid=(1,),
        in_specs=[_whole_spec((n, n)), _whole_spec((n, n)), _whole_spec((n, fp)),
                  _whole_spec((fp, fp)), _whole_spec((1, fp)),
                  _whole_spec((fp, fp)), _whole_spec((fp, fp))],
        out_specs=_whole_spec((n, fp)),
    )(a_pred, a_prev, out_prev_pad, rw_pad, rb_pad, w1_pad, w2_pad)


def classifier_predict(x_pad, w1_pad, b1_pad, w2_pad, b2_pad):
    """Row-tiled classifier: safe at predict_batch_size=100000 on every TPU generation
    (whole-array-in-VMEM at 100K x 128 would exceed v7x physical VMEM)."""
    m, fp = x_pad.shape
    # rows padded to a multiple of 32 (int8 sublane packing); tile at CLS_BLOCK_M when big
    block_m = min(CLS_BLOCK_M, _round_up(m, 32))
    m_pad = _round_up(m, block_m)
    if m_pad != m:
        x_pad = jnp.concatenate(
            [x_pad, jnp.zeros((m_pad - m, fp), x_pad.dtype)], axis=0)
    out = pl.pallas_call(
        _cls_predict_kernel,
        out_shape=jax.ShapeDtypeStruct((m_pad, fp), jnp.int8),
        grid=(m_pad // block_m,),
        in_specs=[
            pl.BlockSpec((block_m, fp), lambda i: (i, 0)),
            pl.BlockSpec((fp, fp), lambda i: (0, 0)),
            pl.BlockSpec((1, fp), lambda i: (0, 0)),
            pl.BlockSpec((fp, fp), lambda i: (0, 0)),
            pl.BlockSpec((1, fp), lambda i: (0, 0)),
        ],
        out_specs=pl.BlockSpec((block_m, fp), lambda i: (i, 0)),
        compiler_params=pltpu.CompilerParams(
            dimension_semantics=("parallel",)),       # independent row blocks
    )(x_pad, w1_pad, b1_pad, w2_pad, b2_pad)
    return out[:m]


# ----------------------------- JAX glue (mirrors PyTorch code) -----------------------------

def build_norm_adj(edge_index, num_nodes):
    """Dense D^{-1/2}(A+I)D^{-1/2} with PyG-style gcn_norm (edge multiplicity counted,
    single in-degree vector on both sides)."""
    src = edge_index[0]
    dst = edge_index[1]
    a = jnp.zeros((num_nodes, num_nodes), jnp.float32)
    a = a.at[dst, src].add(1.0)                       # message src -> dst, count multiplicity
    a = a + jnp.eye(num_nodes, dtype=jnp.float32)     # self loops
    deg = jnp.sum(a, axis=1, keepdims=True)           # in-degree of the target node
    d = jax.lax.rsqrt(jnp.maximum(deg, 1e-12))
    return d * a * d.T


def build_norm_adj_all(input_list, num_nodes):
    """Batched adjacency build: one fused scatter across all timesteps when edge counts
    match (vmap); falls back to a per-timestep loop otherwise."""
    shapes = {inp["edge_index"].shape for inp in input_list}
    if len(shapes) == 1:
        edge_index_all = jnp.stack([inp["edge_index"] for inp in input_list])
        return jax.vmap(lambda ei: build_norm_adj(ei, num_nodes))(edge_index_all)
    return jnp.stack([build_norm_adj(inp["edge_index"], num_nodes) for inp in input_list])


def _pad_cols(x, width):
    n, f = x.shape
    if f >= width:
        return x
    return jnp.concatenate([x, jnp.zeros((n, width - f), x.dtype)], axis=1)


def _pad_2d(w, rows, cols):
    out = jnp.zeros((rows, cols), w.dtype)
    return out.at[: w.shape[0], : w.shape[1]].set(w)


def gather_node_embeddings(node_embeddings, node_indices):
    cls_input = [node_embeddings[node_indices[i]] for i in range(node_indices.shape[0])]
    return jnp.concatenate(cls_input, axis=1)


def predict(node_embeddings, cls_params_pad, gt_node_indices):
    """Classifier predictions (sigmoid+threshold fused into the row-tiled MLP kernel)."""
    predict_batch_size = 100000
    gather_predictions = []
    num_edges = gt_node_indices.shape[1]
    for i in range(1 + num_edges // predict_batch_size):
        idx = gt_node_indices[:, i * predict_batch_size:(i + 1) * predict_batch_size]
        if idx.shape[1] == 0:        # guard empty trailing batch (E exact multiple of B)
            continue
        cls_in = gather_node_embeddings(node_embeddings, idx)
        cls_in_pad = _pad_cols(cls_in, LANE_PAD)
        pred = classifier_predict(cls_in_pad, *cls_params_pad)
        gather_predictions.append(pred[:, :2].astype(jnp.int32))
    return jnp.concatenate(gather_predictions, axis=0)


def double_layer_model_extrapolation_forward(params, input_list,
                                             run_extrapolation_branch=False):
    """Mirrors DoubleLayerModelExtrapolation.forward.

    The reference model's extrapolation branch at t == T-1 produces results that are
    immediately overwritten by the normal branch, so they never affect the returned value;
    that dead work is skipped by default (run_extrapolation_branch=True executes it)."""
    num_steps = len(input_list)
    assert num_steps == params["num_hist_steps"]
    n = params["node_count"]
    fp = LANE_PAD
    out_channels = params["gcn2_w"].shape[1]

    # hoisted, batched precompute: one fused scatter + normalization for all timesteps
    a_hat_all = build_norm_adj_all(input_list, n)                       # [T, N, N]
    x_flat = jnp.concatenate([_pad_cols(inp["x"], fp) for inp in input_list], axis=0)  # [T*N, fp]

    # lane-dense (zero-padded) weights
    gcn1_w = _pad_2d(params["gcn1_w"], fp, fp)
    gcn2_w = _pad_2d(params["gcn2_w"], fp, fp)

    # the whole normal-branch time loop as ONE fused pallas_call (all T resident in VMEM)
    # TODO(synk): EvolveGCNH's GRU / TopK-pooling weight evolution (custom 3-arg variant,
    # source unavailable) is not reproduced; the GCN weights are static across timesteps.
    out_flat = gcn_all_steps(a_hat_all, x_flat, gcn1_w, gcn2_w)         # [T*N, fp]

    if run_extrapolation_branch and num_steps >= 2:
        # `out` / `X` entering iteration t == T-1 come from timestep T-2.
        out_prev_pad = out_flat[(num_steps - 2) * n:(num_steps - 1) * n, :]
        out_prev = out_prev_pad[:, :out_channels]
        cls_params_pad = (
            _pad_2d(params["cls_w1"], fp, fp), _pad_2d(params["cls_b1"], 1, fp),
            _pad_2d(params["cls_w2"], fp, fp), _pad_2d(params["cls_b2"], 1, fp))
        predictions = predict(out_prev, cls_params_pad, input_list[-1]["edge_index"])
        # TODO(synk): the original passes `predictions` ([E,2]) directly as an edge_index,
        # which is ill-formed in PyG; we transpose it to [2,E] so the graph conv is defined.
        a_pred = build_norm_adj(predictions.T, n)
        a_prev = a_hat_all[num_steps - 2]
        rw = _pad_2d(params["reshaper_w"], fp, fp)
        rb = _pad_2d(params["reshaper_b"], 1, fp)
        _ = extrapolation_step(a_pred, a_prev, out_prev_pad, rw, rb, gcn1_w, gcn2_w)
        # result intentionally unused: the reference forward overwrites it immediately.

    return out_flat[(num_steps - 1) * n: num_steps * n, :out_channels]


# ----------------------------- main -----------------------------

if __name__ == "__main__":
    node_count = 16
    in_channels = 8
    hidden_channels = 32
    out_channels = 16
    hidden_feats = 32
    num_hist_steps = 3
    num_edges = 24

    key = jax.random.PRNGKey(0)
    keys = jax.random.split(key, 16)

    params = {
        "node_count": node_count,
        "num_hist_steps": num_hist_steps,
        # recurrent_1 / recurrent_2 GCN weights  ([in, out] layout)
        "gcn1_w": 0.1 * jax.random.normal(keys[0], (in_channels, hidden_channels), jnp.float32),
        "gcn2_w": 0.1 * jax.random.normal(keys[1], (hidden_channels, out_channels), jnp.float32),
        # reshaper_layer: Linear(out_channels -> in_channels)
        "reshaper_w": 0.1 * jax.random.normal(keys[2], (out_channels, in_channels), jnp.float32),
        "reshaper_b": 0.1 * jax.random.normal(keys[3], (1, in_channels), jnp.float32),
        # Classifier: Linear(2*out_channels -> hidden_feats) -> ReLU -> Linear(hidden_feats -> 2)
        "cls_w1": 0.1 * jax.random.normal(keys[4], (2 * out_channels, hidden_feats), jnp.float32),
        "cls_b1": 0.1 * jax.random.normal(keys[5], (1, hidden_feats), jnp.float32),
        "cls_w2": 0.1 * jax.random.normal(keys[6], (hidden_feats, 2), jnp.float32),
        "cls_b2": 0.1 * jax.random.normal(keys[7], (1, 2), jnp.float32),
    }

    input_list = []
    for t in range(num_hist_steps):
        kx, ke = jax.random.split(keys[8 + t])
        input_list.append({
            "x": jax.random.normal(kx, (node_count, in_channels), jnp.float32),
            "edge_index": jax.random.randint(ke, (2, num_edges), 0, node_count, jnp.int32),
        })

    out = double_layer_model_extrapolation_forward(params, input_list)
    out = jax.block_until_ready(out)
    assert out.shape == (node_count, out_channels)
    assert out.dtype == jnp.float32

    # parity check: the (disabled-by-default) dead extrapolation branch does not change the
    # returned value and its fused kernels (classifier + extrapolation GCN) run cleanly.
    out_with_branch = double_layer_model_extrapolation_forward(
        params, input_list, run_extrapolation_branch=True)
    out_with_branch = jax.block_until_ready(out_with_branch)
    assert jnp.allclose(out, out_with_branch)

    print("KERNEL_OK")
</pallas_src>

<mosaic_0001>
module attributes {stable_mosaic.version = 11 : i64} {
  func.func @_gcn_all_steps_kernel(%arg0: i32, %arg1: memref<3x16x16xf32, #tpu.memory_space<vmem>>, %arg2: memref<48x128xf32, #tpu.memory_space<vmem>>, %arg3: memref<128x128xf32, #tpu.memory_space<vmem>>, %arg4: memref<128x128xf32, #tpu.memory_space<vmem>>, %arg5: memref<48x128xf32, #tpu.memory_space<vmem>>, %arg6: memref<48x128xf32, #tpu.memory_space<vmem>>) attributes {dimension_semantics = [#tpu.dimension_semantics<arbitrary>], iteration_bounds = array<i64: 1>, scalar_prefetch = 0 : i64, scratch_operands = 1 : i64, tpu.core_type = #tpu.core_type<tc>, window_params = [{pipeline_mode = #tpu.pipeline_mode<synchronous>, transform_indices = @transform_0, window_bounds = array<i64: 3, 16, 16>}, {pipeline_mode = #tpu.pipeline_mode<synchronous>, transform_indices = @transform_1, window_bounds = array<i64: 48, 128>}, {pipeline_mode = #tpu.pipeline_mode<synchronous>, transform_indices = @transform_2, window_bounds = array<i64: 128, 128>}, {pipeline_mode = #tpu.pipeline_mode<synchronous>, transform_indices = @transform_3, window_bounds = array<i64: 128, 128>}, {pipeline_mode = #tpu.pipeline_mode<synchronous>, transform_indices = @transform_4, window_bounds = array<i64: 48, 128>}]} {
    %c0 = arith.constant 0 : index
    %c0_0 = arith.constant 0 : index
    %0 = vector.load %arg2[%c0, %c0_0] : memref<48x128xf32, #tpu.memory_space<vmem>>, vector<48x128xf32>
    %c0_1 = arith.constant 0 : index
    %c0_2 = arith.constant 0 : index
    %1 = vector.load %arg3[%c0_1, %c0_2] : memref<128x128xf32, #tpu.memory_space<vmem>>, vector<128x128xf32>
    %cst = arith.constant dense<0.000000e+00> : vector<48x128xf32>
    %2 = tpu.matmul %0, %1, %cst {dimension_numbers = #tpu.dot_dimension_numbers<[1], [0], [0], [1], [0, 0, 1, 1], [], []>} : vector<48x128xf32>, vector<128x128xf32>, vector<48x128xf32> -> vector<48x128xf32>
    %c0_3 = arith.constant 0 : index
    %c0_4 = arith.constant 0 : index
    %c0_5 = arith.constant 0 : index
    %3 = vector.load %arg1[%c0_3, %c0_4, %c0_5] : memref<3x16x16xf32, #tpu.memory_space<vmem>>, vector<1x16x16xf32>
    %4 = vector.shape_cast %3 : vector<1x16x16xf32> to vector<16x16xf32>
    %5 = vector.extract_strided_slice %2 {offsets = [0, 0], sizes = [16, 128], strides = [1, 1]} : vector<48x128xf32> to vector<16x128xf32>
    %cst_6 = arith.constant dense<0.000000e+00> : vector<16x128xf32>
    %6 = tpu.matmul %4, %5, %cst_6 {dimension_numbers = #tpu.dot_dimension_numbers<[1], [0], [0], [1], [0, 0, 1, 1], [], []>} : vector<16x16xf32>, vector<16x128xf32>, vector<16x128xf32> -> vector<16x128xf32>
    %c0_7 = arith.constant 0 : index
    %c0_8 = arith.constant 0 : index
    %7 = vector.load %arg6[%c0_7, %c0_8] : memref<48x128xf32, #tpu.memory_space<vmem>>, vector<16x128xf32>
    tpu.vector_store %arg6[%c0_7, %c0_8], %6 {strides = array<i32>} : memref<48x128xf32, #tpu.memory_space<vmem>>, vector<16x128xf32>,
    %c1 = arith.constant 1 : index
    %c0_9 = arith.constant 0 : index
    %c0_10 = arith.constant 0 : index
    %8 = vector.load %arg1[%c1, %c0_9, %c0_10] : memref<3x16x16xf32, #tpu.memory_space<vmem>>, vector<1x16x16xf32>
    %9 = vector.shape_cast %8 : vector<1x16x16xf32> to vector<16x16xf32>
    %10 = vector.extract_strided_slice %2 {offsets = [16, 0], sizes = [16, 128], strides = [1, 1]} : vector<48x128xf32> to vector<16x128xf32>
    %cst_11 = arith.constant dense<0.000000e+00> : vector<16x128xf32>
    %11 = tpu.matmul %9, %10, %cst_11 {dimension_numbers = #tpu.dot_dimension_numbers<[1], [0], [0], [1], [0, 0, 1, 1], [], []>} : vector<16x16xf32>, vector<16x128xf32>, vector<16x128xf32> -> vector<16x128xf32>
    %c16 = arith.constant 16 : index
    %c0_12 = arith.constant 0 : index
    %12 = vector.load %arg6[%c16, %c0_12] : memref<48x128xf32, #tpu.memory_space<vmem>>, vector<16x128xf32>
    tpu.vector_store %arg6[%c16, %c0_12], %11 {strides = array<i32>} : memref<48x128xf32, #tpu.memory_space<vmem>>, vector<16x128xf32>,
    %c2 = arith.constant 2 : index
    %c0_13 = arith.constant 0 : index
    %c0_14 = arith.constant 0 : index
    %13 = vector.load %arg1[%c2, %c0_13, %c0_14] : memref<3x16x16xf32, #tpu.memory_space<vmem>>, vector<1x16x16xf32>
    %14 = vector.shape_cast %13 : vector<1x16x16xf32> to vector<16x16xf32>
    %15 = vector.extract_strided_slice %2 {offsets = [32, 0], sizes = [16, 128], strides = [1, 1]} : vector<48x128xf32> to vector<16x128xf32>
    %cst_15 = arith.constant dense<0.000000e+00> : vector<16x128xf32>
    %16 = tpu.matmul %14, %15, %cst_15 {dimension_numbers = #tpu.dot_dimension_numbers<[1], [0], [0], [1], [0, 0, 1, 1], [], []>} : vector<16x16xf32>, vector<16x128xf32>, vector<16x128xf32> -> vector<16x128xf32>
    %c32 = arith.constant 32 : index
    %c0_16 = arith.constant 0 : index
    %17 = vector.load %arg6[%c32, %c0_16] : memref<48x128xf32, #tpu.memory_space<vmem>>, vector<16x128xf32>
    tpu.vector_store %arg6[%c32, %c0_16], %16 {strides = array<i32>} : memref<48x128xf32, #tpu.memory_space<vmem>>, vector<16x128xf32>,
    %c0_17 = arith.constant 0 : index
    %c0_18 = arith.constant 0 : index
    %18 = vector.load %arg6[%c0_17, %c0_18] : memref<48x128xf32, #tpu.memory_space<vmem>>, vector<48x128xf32>
    %c0_19 = arith.constant 0 : index
    %c0_20 = arith.constant 0 : index
    %19 = vector.load %arg4[%c0_19, %c0_20] : memref<128x128xf32, #tpu.memory_space<vmem>>, vector<128x128xf32>
    %cst_21 = arith.constant dense<0.000000e+00> : vector<48x128xf32>
    %20 = tpu.matmul %18, %19, %cst_21 {dimension_numbers = #tpu.dot_dimension_numbers<[1], [0], [0], [1], [0, 0, 1, 1], [], []>} : vector<48x128xf32>, vector<128x128xf32>, vector<48x128xf32> -> vector<48x128xf32>
    %c0_22 = arith.constant 0 : index
    %c0_23 = arith.constant 0 : index
    %c0_24 = arith.constant 0 : index
    %21 = vector.load %arg1[%c0_22, %c0_23, %c0_24] : memref<3x16x16xf32, #tpu.memory_space<vmem>>, vector<1x16x16xf32>
    %22 = vector.shape_cast %21 : vector<1x16x16xf32> to vector<16x16xf32>
    %23 = vector.extract_strided_slice %20 {offsets = [0, 0], sizes = [16, 128], strides = [1, 1]} : vector<48x128xf32> to vector<16x128xf32>
    %cst_25 = arith.constant dense<0.000000e+00> : vector<16x128xf32>
    %24 = tpu.matmul %22, %23, %cst_25 {dimension_numbers = #tpu.dot_dimension_numbers<[1], [0], [0], [1], [0, 0, 1, 1], [], []>} : vector<16x16xf32>, vector<16x128xf32>, vector<16x128xf32> -> vector<16x128xf32>
    %c0_26 = arith.constant 0 : index
    %c0_27 = arith.constant 0 : index
    %25 = vector.load %arg5[%c0_26, %c0_27] : memref<48x128xf32, #tpu.memory_space<vmem>>, vector<16x128xf32>
    tpu.vector_store %arg5[%c0_26, %c0_27], %24 {strides = array<i32>} : memref<48x128xf32, #tpu.memory_space<vmem>>, vector<16x128xf32>,
    %c1_28 = arith.constant 1 : index
    %c0_29 = arith.constant 0 : index
    %c0_30 = arith.constant 0 : index
    %26 = vector.load %arg1[%c1_28, %c0_29, %c0_30] : memref<3x16x16xf32, #tpu.memory_space<vmem>>, vector<1x16x16xf32>
    %27 = vector.shape_cast %26 : vector<1x16x16xf32> to vector<16x16xf32>
    %28 = vector.extract_strided_slice %20 {offsets = [16, 0], sizes = [16, 128], strides = [1, 1]} : vector<48x128xf32> to vector<16x128xf32>
    %cst_31 = arith.constant dense<0.000000e+00> : vector<16x128xf32>
    %29 = tpu.matmul %27, %28, %cst_31 {dimension_numbers = #tpu.dot_dimension_numbers<[1], [0], [0], [1], [0, 0, 1, 1], [], []>} : vector<16x16xf32>, vector<16x128xf32>, vector<16x128xf32> -> vector<16x128xf32>
    %c16_32 = arith.constant 16 : index
    %c0_33 = arith.constant 0 : index
    %30 = vector.load %arg5[%c16_32, %c0_33] : memref<48x128xf32, #tpu.memory_space<vmem>>, vector<16x128xf32>
    tpu.vector_store %arg5[%c16_32, %c0_33], %29 {strides = array<i32>} : memref<48x128xf32, #tpu.memory_space<vmem>>, vector<16x128xf32>,
    %c2_34 = arith.constant 2 : index
    %c0_35 = arith.constant 0 : index
    %c0_36 = arith.constant 0 : index
    %31 = vector.load %arg1[%c2_34, %c0_35, %c0_36] : memref<3x16x16xf32, #tpu.memory_space<vmem>>, vector<1x16x16xf32>
    %32 = vector.shape_cast %31 : vector<1x16x16xf32> to vector<16x16xf32>
    %33 = vector.extract_strided_slice %20 {offsets = [32, 0], sizes = [16, 128], strides = [1, 1]} : vector<48x128xf32> to vector<16x128xf32>
    %cst_37 = arith.constant dense<0.000000e+00> : vector<16x128xf32>
    %34 = tpu.matmul %32, %33, %cst_37 {dimension_numbers = #tpu.dot_dimension_numbers<[1], [0], [0], [1], [0, 0, 1, 1], [], []>} : vector<16x16xf32>, vector<16x128xf32>, vector<16x128xf32> -> vector<16x128xf32>
    %c32_38 = arith.constant 32 : index
    %c0_39 = arith.constant 0 : index
    %35 = vector.load %arg5[%c32_38, %c0_39] : memref<48x128xf32, #tpu.memory_space<vmem>>, vector<16x128xf32>
    tpu.vector_store %arg5[%c32_38, %c0_39], %34 {strides = array<i32>} : memref<48x128xf32, #tpu.memory_space<vmem>>, vector<16x128xf32>,
    return
  }
  func.func @transform_0(%arg0: i32) -> (i32, i32, i32) {
    %c0_i32 = arith.constant 0 : i32
    %c0_i32_0 = arith.constant 0 : i32
    %c0_i32_1 = arith.constant 0 : i32
    %c0_i32_2 = arith.constant 0 : i32
    return %c0_i32, %c0_i32_0, %c0_i32_1 : i32, i32, i32
  }
  func.func @transform_1(%arg0: i32) -> (i32, i32) {
    %c0_i32 = arith.constant 0 : i32
    %c0_i32_0 = arith.constant 0 : i32
    %c0_i32_1 = arith.constant 0 : i32
    return %c0_i32, %c0_i32_0 : i32, i32
  }
  func.func @transform_2(%arg0: i32) -> (i32, i32) {
    %c0_i32 = arith.constant 0 : i32
    %c0_i32_0 = arith.constant 0 : i32
    %c0_i32_1 = arith.constant 0 : i32
    return %c0_i32, %c0_i32_0 : i32, i32
  }
  func.func @transform_3(%arg0: i32) -> (i32, i32) {
    %c0_i32 = arith.constant 0 : i32
    %c0_i32_0 = arith.constant 0 : i32
    %c0_i32_1 = arith.constant 0 : i32
    return %c0_i32, %c0_i32_0 : i32, i32
  }
  func.func @transform_4(%arg0: i32) -> (i32, i32) {
    %c0_i32 = arith.constant 0 : i32
    %c0_i32_0 = arith.constant 0 : i32
    %c0_i32_1 = arith.constant 0 : i32
    return %c0_i32, %c0_i32_0 : i32, i32
  }
}

</mosaic_0001>

<llo_original>
// kernel: tpu_custom_call.1
$region0: #{tpu_custom_call.1}
  #allocation0 [shape = 'u32[]', space=smem, size = 0x4, offset = 0x4, fixed_abs, tag = 'smem constant byte address 0x4 - core index']
  #allocation1 [shape = 'u32[72,128]{1,0:T(1,128)}', space=vmem, size = 0x9000, scoped, tag = 'internal scratch']
  #allocation2 [shape = 'f32[48,128]{1,0:T(8,128)}', space=vmem, size = 0x6000, scoped, tag = 'scratch operand']
  %s0 = inlined_call_operand.hbm [shape: f32[3,16,16], index: 0, kind: input, shape index: {}]
  %s1 = inlined_call_operand.hbm [shape: f32[48,128], index: 1, kind: input, shape index: {}]
  %s2 = inlined_call_operand.hbm [shape: f32[128,128], index: 2, kind: input, shape index: {}]
  %s3 = inlined_call_operand.hbm [shape: f32[128,128], index: 3, kind: input, shape index: {}]
  %s4 = inlined_call_operand.hbm [shape: f32[48,128], index: 4, kind: output, shape index: {}]
  %s5 = sld [smem:[#allocation0]]
  $region42: #{tpu_custom_call.1} parent=0
    _
  %s7 = ssub.s32 1, %s5
  %s8 = scalar_select 0, %s7, %s5
  $region1: #{tpu_custom_call.1} parent=0
    #allocation3 [shape = 'u8[24576]{0}', space=vmem, size = 0x6000, scoped, tag = 'input window, operand 0, single buffered']
    #allocation4 [shape = 's32[1]{0}', space=sflag, size = 0x4, scoped, tag = 'scoped memory for tpu_custom_call.1']
    #allocation5 [shape = 's32[1]{0}', space=sflag, size = 0x4, scoped, tag = 'scoped memory for tpu_custom_call.1']
    #allocation6 [shape = 'u8[24576]{0}', space=vmem, size = 0x6000, scoped, tag = 'input window, operand 1, single buffered']
    #allocation7 [shape = 's32[1]{0}', space=sflag, size = 0x4, scoped, tag = 'scoped memory for tpu_custom_call.1']
    #allocation8 [shape = 'u8[65536]{0}', space=vmem, size = 0x10000, scoped, tag = 'input window, operand 2, single buffered']
    #allocation9 [shape = 'u8[65536]{0}', space=vmem, size = 0x10000, scoped, tag = 'input window, operand 3, single buffered']
    #allocation10 [shape = 's32[1]{0}', space=sflag, size = 0x4, scoped, tag = 'scoped memory for tpu_custom_call.1']
    #allocation11 [shape = 'u8[24576]{0}', space=vmem, size = 0x6000, scoped, tag = 'output window, operand 0, single buffered']
    %9 = vsyncpa [#allocation4], 0
    %10 = vsyncpa [#allocation7], 0
    %11 = vsyncpa [#allocation10], 0
    %12 = vsyncpa [#allocation5], 0
    // Predicated region
    $region2: #{tpu_custom_call.1} parent=1 // pred_check
      _
    $region3: #{tpu_custom_call.1} parent=1 // pred_check_branch
      %14 = sbr.rel (0) target = $region5
    $region4: #{tpu_custom_call.1} parent=1 // pred_region
      %16 = vsyncadd [#allocation4], 0
      %s17 = sshll.u32 %s0, 4
      %s18 = int_to_ptr.hbm [resolvable:$true] %s17
      %s19 = sshll.u32 [#allocation3], 4
      %s20 = int_to_ptr.vmem [resolvable:$true] %s19
      %25 = dma.hbm_to_vmem [thread:$0]  %s18, 768, %s20, [#allocation4], 128, 128, 8
    $region5: #{tpu_custom_call.1} parent=1 // pred_fallthru
      _
    // Predicated region
    $region6: #{tpu_custom_call.1} parent=1 // pred_check
      _
    $region7: #{tpu_custom_call.1} parent=1 // pred_check_branch
      %27 = sbr.rel (0) target = $region9
    $region8: #{tpu_custom_call.1} parent=1 // pred_region
      %29 = vsyncadd [#allocation7], 0
      %s30 = sshll.u32 %s1, 4
      %s31 = int_to_ptr.hbm [resolvable:$true] %s30
      %s32 = sshll.u32 [#allocation6], 4
      %s33 = int_to_ptr.vmem [resolvable:$true] %s32
      %38 = dma.hbm_to_vmem [thread:$0]  %s31, 768, %s33, [#allocation7], 128, 128, 8
    $region9: #{tpu_custom_call.1} parent=1 // pred_fallthru
      _
    // Predicated region
    $region10: #{tpu_custom_call.1} parent=1 // pred_check
      _
    $region11: #{tpu_custom_call.1} parent=1 // pred_check_branch
      %40 = sbr.rel (0) target = $region13
    $region12: #{tpu_custom_call.1} parent=1 // pred_region
      %42 = vsyncadd [#allocation7], 0
      %s43 = sshll.u32 %s2, 4
      %s44 = int_to_ptr.hbm [resolvable:$true] %s43
      %s45 = sshll.u32 [#allocation8], 4
      %s46 = int_to_ptr.vmem [resolvable:$true] %s45
      %51 = dma.hbm_to_vmem [thread:$0]  %s44, 2048, %s46, [#allocation7], 128, 128, 8
    $region13: #{tpu_custom_call.1} parent=1 // pred_fallthru
      _
    // Predicated region
    $region14: #{tpu_custom_call.1} parent=1 // pred_check
      _
    $region15: #{tpu_custom_call.1} parent=1 // pred_check_branch
      %53 = sbr.rel (0) target = $region17
    $region16: #{tpu_custom_call.1} parent=1 // pred_region
      %55 = vsyncadd [#allocation10], 0
      %s56 = sshll.u32 %s3, 4
      %s57 = int_to_ptr.hbm [resolvable:$true] %s56
      %s58 = sshll.u32 [#allocation9], 4
      %s59 = int_to_ptr.vmem [resolvable:$true] %s58
      %64 = dma.hbm_to_vmem [thread:$0]  %s57, 2048, %s59, [#allocation10], 128, 128, 8
    $region17: #{tpu_custom_call.1} parent=1 // pred_fallthru
      _
    // Predicated region
    $region18: #{tpu_custom_call.1} parent=1 // pred_check
      _
    $region19: #{tpu_custom_call.1} parent=1 // pred_check_branch
      %66 = sbr.rel (0) target = $region21
    $region20: #{tpu_custom_call.1} parent=1 // pred_region
      %68 = dma.done [#allocation4], 768
    $region21: #{tpu_custom_call.1} parent=1 // pred_fallthru
      _
    // Predicated region
    $region22: #{tpu_custom_call.1} parent=1 // pred_check
      _
    $region23: #{tpu_custom_call.1} parent=1 // pred_check_branch
      %70 = sbr.rel (0) target = $region25
    $region24: #{tpu_custom_call.1} parent=1 // pred_region
      %72 = dma.done [#allocation7], 768
    $region25: #{tpu_custom_call.1} parent=1 // pred_fallthru
      _
    // Predicated region
    $region26: #{tpu_custom_call.1} parent=1 // pred_check
      _
    $region27: #{tpu_custom_call.1} parent=1 // pred_check_branch
      %74 = sbr.rel (0) target = $region29
    $region28: #{tpu_custom_call.1} parent=1 // pred_region
      %76 = dma.done [#allocation7], 2048
    $region29: #{tpu_custom_call.1} parent=1 // pred_fallthru
      _
    // Predicated region
    $region30: #{tpu_custom_call.1} parent=1 // pred_check
      _
    $region31: #{tpu_custom_call.1} parent=1 // pred_check_branch
      %78 = sbr.rel (0) target = $region33
    $region32: #{tpu_custom_call.1} parent=1 // pred_region
      %80 = dma.done [#allocation10], 2048
    $region33: #{tpu_custom_call.1} parent=1 // pred_fallthru
      _
    %v81 = vld [vmem:[#allocation6] sm:$0xff]
    %v82 = vld [vmem:[#allocation6 + $0x8] sm:$0xff]
    %v83 = vld [vmem:[#allocation6 + $0x10] sm:$0xff]
    %v84 = vld [vmem:[#allocation6 + $0x18] sm:$0xff]
    %v85 = vld [vmem:[#allocation6 + $0x20] sm:$0xff]
    %v86 = vld [vmem:[#allocation6 + $0x28] sm:$0xff]
    %v87 = vld [vmem:[#allocation8] sm:$0xff]
    %v88 = vld [vmem:[#allocation8 + $0x8] sm:$0xff]
    %v89 = vld [vmem:[#allocation8 + $0x10] sm:$0xff]
    %v90 = vld [vmem:[#allocation8 + $0x18] sm:$0xff]
    %v91 = vld [vmem:[#allocation8 + $0x20] sm:$0xff]
    %v92 = vld [vmem:[#allocation8 + $0x28] sm:$0xff]
    %v93 = vld [vmem:[#allocation8 + $0x30] sm:$0xff]
    %v94 = vld [vmem:[#allocation8 + $0x38] sm:$0xff]
    %v95 = vld [vmem:[#allocation8 + $0x40] sm:$0xff]
    %v96 = vld [vmem:[#allocation8 + $0x48] sm:$0xff]
    %v97 = vld [vmem:[#allocation8 + $0x50] sm:$0xff]
    %v98 = vld [vmem:[#allocation8 + $0x58] sm:$0xff]
    %v99 = vld [vmem:[#allocation8 + $0x60] sm:$0xff]
    %v100 = vld [vmem:[#allocation8 + $0x68] sm:$0xff]
    %v101 = vld [vmem:[#allocation8 + $0x70] sm:$0xff]
    %v102 = vld [vmem:[#allocation8 + $0x78] sm:$0xff]
    %103 = vmatpush.msra.mxu0 %v102
    %104 = vmatpush.msra.mxu0 %v101
    %105 = vmatpush.msra.mxu0 %v100
    %106 = vmatpush.msra.mxu0 %v99
    %107 = vmatpush.msra.mxu0 %v98
    %108 = vmatpush.msra.mxu0 %v97
    %109 = vmatpush.msra.mxu0 %v96
    %110 = vmatpush.msra.mxu0 %v95
    %111 = vmatpush.msra.mxu0 %v94
    %112 = vmatpush.msra.mxu0 %v93
    %113 = vmatpush.msra.mxu0 %v92
    %114 = vmatpush.msra.mxu0 %v91
    %115 = vmatpush.msra.mxu0 %v90
    %116 = vmatpush.msra.mxu0 %v89
    %117 = vmatpush.msra.mxu0 %v88
    %118 = vmatpush.msra.mxu0 %v87
    %119 = vmatmul.f32.gmra.mxu0 %v81
    %v120 = vpop.f32.mrf.mxu0
    %v121 = vadd.f32 0.0, %v120
    %122 = vmatmul.f32.gmra.mxu0 %v82
    %v123 = vpop.f32.mrf.mxu0
    %v124 = vadd.f32 0.0, %v123
    %125 = vmatmul.f32.gmra.mxu0 %v83
    %v126 = vpop.f32.mrf.mxu0
    %v127 = vadd.f32 0.0, %v126
    %128 = vmatmul.f32.gmra.mxu0 %v84
    %v129 = vpop.f32.mrf.mxu0
    %v130 = vadd.f32 0.0, %v129
    %131 = vmatmul.f32.gmra.mxu0 %v85
    %v132 = vpop.f32.mrf.mxu0
    %v133 = vadd.f32 0.0, %v132
    %134 = vmatmul.f32.gmra.mxu0 %v86
    %v135 = vpop.f32.mrf.mxu0
    %v136 = vadd.f32 0.0, %v135
    %137 = vdwg.mxu0
    %v138 = vld [vmem:[#allocation3] sm:$0xff]
    %v139 = vld [vmem:[#allocation3 + $0x8] sm:$0xff]
    %vm140 = vcmask 130048
    %v142 = vsel %vm140, %v138, 0
    %v145 = vsel %vm140, %v139, 0
    %147 = vmatpush.msra.mxu0 0.0
    %148 = vmatpush.msra.mxu0 0.0
    %149 = vmatpush.msra.mxu0 0.0
    %150 = vmatpush.msra.mxu0 0.0
    %151 = vmatpush.msra.mxu0 0.0
    %152 = vmatpush.msra.mxu0 0.0
    %153 = vmatpush.msra.mxu0 0.0
    %154 = vmatpush.msra.mxu0 0.0
    %155 = vmatpush.msra.mxu0 0.0
    %156 = vmatpush.msra.mxu0 0.0
    %157 = vmatpush.msra.mxu0 0.0
    %158 = vmatpush.msra.mxu0 0.0
    %159 = vmatpush.msra.mxu0 0.0
    %160 = vmatpush.msra.mxu0 0.0
    %161 = vmatpush.msra.mxu0 %v124
    %162 = vmatpush.msra.mxu0 %v121
    %163 = vmatmul.f32.gmra.mxu0 %v142
    %v164 = vpop.f32.mrf.mxu0
    %v165 = vadd.f32 0.0, %v164
    %166 = vmatmul.f32.gmra.mxu0 %v145
    %v167 = vpop.f32.mrf.mxu0
    %v168 = vadd.f32 0.0, %v167
    %169 = vdwg.mxu0
    %170 = vst [vmem:[#allocation2] sm:$0xff] %v165
    %171 = vst [vmem:[#allocation2 + $0x8] sm:$0xff] %v168
    %s172 = scalar_lea.vmem [#allocation3], 16
    %v173 = vld [vmem:[%s172] sm:$0xff]
    %v174 = vld [vmem:[%s172 + $0x8] sm:$0xff]
    %v176 = vsel %vm140, %v173, 0
    %v179 = vsel %vm140, %v174, 0
    %181 = vmatpush.msra.mxu0 0.0
    %182 = vmatpush.msra.mxu0 0.0
    %183 = vmatpush.msra.mxu0 0.0
    %184 = vmatpush.msra.mxu0 0.0
    %185 = vmatpush.msra.mxu0 0.0
    %186 = vmatpush.msra.mxu0 0.0
    %187 = vmatpush.msra.mxu0 0.0
    %188 = vmatpush.msra.mxu0 0.0
    %189 = vmatpush.msra.mxu0 0.0
    %190 = vmatpush.msra.mxu0 0.0
    %191 = vmatpush.msra.mxu0 0.0
    %192 = vmatpush.msra.mxu0 0.0
    %193 = vmatpush.msra.mxu0 0.0
    %194 = vmatpush.msra.mxu0 0.0
    %195 = vmatpush.msra.mxu0 %v130
    %196 = vmatpush.msra.mxu0 %v127
    %197 = vmatmul.f32.gmra.mxu0 %v176
    %v198 = vpop.f32.mrf.mxu0
    %v199 = vadd.f32 0.0, %v198
    %200 = vmatmul.f32.gmra.mxu0 %v179
    %v201 = vpop.f32.mrf.mxu0
    %v202 = vadd.f32 0.0, %v201
    %203 = vdwg.mxu0
    %204 = vst [vmem:[#allocation2 + $0x10] sm:$0xff] %v199
    %205 = vst [vmem:[#allocation2 + $0x18] sm:$0xff] %v202
    %s206 = scalar_lea.vmem [#allocation3], 32
    %v207 = vld [vmem:[%s206] sm:$0xff]
    %v208 = vld [vmem:[%s206 + $0x8] sm:$0xff]
    %v210 = vsel %vm140, %v207, 0
    %v213 = vsel %vm140, %v208, 0
    %215 = vmatpush.msra.mxu0 0.0
    %216 = vmatpush.msra.mxu0 0.0
    %217 = vmatpush.msra.mxu0 0.0
    %218 = vmatpush.msra.mxu0 0.0
    %219 = vmatpush.msra.mxu0 0.0
    %220 = vmatpush.msra.mxu0 0.0
    %221 = vmatpush.msra.mxu0 0.0
    %222 = vmatpush.msra.mxu0 0.0
    %223 = vmatpush.msra.mxu0 0.0
    %224 = vmatpush.msra.mxu0 0.0
    %225 = vmatpush.msra.mxu0 0.0
    %226 = vmatpush.msra.mxu0 0.0
    %227 = vmatpush.msra.mxu0 0.0
    %228 = vmatpush.msra.mxu0 0.0
    %229 = vmatpush.msra.mxu0 %v136
    %230 = vmatpush.msra.mxu0 %v133
    %231 = vmatmul.f32.gmra.mxu0 %v210
    %v232 = vpop.f32.mrf.mxu0
    %v233 = vadd.f32 0.0, %v232
    %234 = vmatmul.f32.gmra.mxu0 %v213
    %v235 = vpop.f32.mrf.mxu0
    %v236 = vadd.f32 0.0, %v235
    %237 = vdwg.mxu0
    %238 = vst [vmem:[#allocation2 + $0x20] sm:$0xff] %v233
    %239 = vst [vmem:[#allocation2 + $0x28] sm:$0xff] %v236
    %v240 = vld [vmem:[#allocation2] sm:$0xff]
    %v241 = vld [vmem:[#allocation2 + $0x8] sm:$0xff]
    %v242 = vld [vmem:[#allocation2 + $0x10] sm:$0xff]
    %v243 = vld [vmem:[#allocation2 + $0x18] sm:$0xff]
    %v244 = vld [vmem:[#allocation2 + $0x20] sm:$0xff]
    %v245 = vld [vmem:[#allocation2 + $0x28] sm:$0xff]
    %v246 = vld [vmem:[#allocation9] sm:$0xff]
    %v247 = vld [vmem:[#allocation9 + $0x8] sm:$0xff]
    %v248 = vld [vmem:[#allocation9 + $0x10] sm:$0xff]
    %v249 = vld [vmem:[#allocation9 + $0x18] sm:$0xff]
    %v250 = vld [vmem:[#allocation9 + $0x20] sm:$0xff]
    %v251 = vld [vmem:[#allocation9 + $0x28] sm:$0xff]
    %v252 = vld [vmem:[#allocation9 + $0x30] sm:$0xff]
    %v253 = vld [vmem:[#allocation9 + $0x38] sm:$0xff]
    %v254 = vld [vmem:[#allocation9 + $0x40] sm:$0xff]
    %v255 = vld [vmem:[#allocation9 + $0x48] sm:$0xff]
    %v256 = vld [vmem:[#allocation9 + $0x50] sm:$0xff]
    %v257 = vld [vmem:[#allocation9 + $0x58] sm:$0xff]
    %v258 = vld [vmem:[#allocation9 + $0x60] sm:$0xff]
    %v259 = vld [vmem:[#allocation9 + $0x68] sm:$0xff]
    %v260 = vld [vmem:[#allocation9 + $0x70] sm:$0xff]
    %v261 = vld [vmem:[#allocation9 + $0x78] sm:$0xff]
    %262 = vmatpush.msra.mxu0 %v261
    %263 = vmatpush.msra.mxu0 %v260
    %264 = vmatpush.msra.mxu0 %v259
    %265 = vmatpush.msra.mxu0 %v258
    %266 = vmatpush.msra.mxu0 %v257
    %267 = vmatpush.msra.mxu0 %v256
    %268 = vmatpush.msra.mxu0 %v255
    %269 = vmatpush.msra.mxu0 %v254
    %270 = vmatpush.msra.mxu0 %v253
    %271 = vmatpush.msra.mxu0 %v252
    %272 = vmatpush.msra.mxu0 %v251
    %273 = vmatpush.msra.mxu0 %v250
    %274 = vmatpush.msra.mxu0 %v249
    %275 = vmatpush.msra.mxu0 %v248
    %276 = vmatpush.msra.mxu0 %v247
    %277 = vmatpush.msra.mxu0 %v246
    %278 = vmatmul.f32.gmra.mxu0 %v240
    %v279 = vpop.f32.mrf.mxu0
    %v280 = vadd.f32 0.0, %v279
    %281 = vmatmul.f32.gmra.mxu0 %v241
    %v282 = vpop.f32.mrf.mxu0
    %v283 = vadd.f32 0.0, %v282
    %284 = vmatmul.f32.gmra.mxu0 %v242
    %v285 = vpop.f32.mrf.mxu0
    %v286 = vadd.f32 0.0, %v285
    %287 = vmatmul.f32.gmra.mxu0 %v243
    %v288 = vpop.f32.mrf.mxu0
    %v289 = vadd.f32 0.0, %v288
    %290 = vmatmul.f32.gmra.mxu0 %v244
    %v291 = vpop.f32.mrf.mxu0
    %v292 = vadd.f32 0.0, %v291
    %293 = vmatmul.f32.gmra.mxu0 %v245
    %v294 = vpop.f32.mrf.mxu0
    %v295 = vadd.f32 0.0, %v294
    %296 = vdwg.mxu0
    %v297 = vld [vmem:[#allocation3] sm:$0xff]
    %v298 = vld [vmem:[#allocation3 + $0x8] sm:$0xff]
    %v300 = vsel %vm140, %v297, 0
    %v303 = vsel %vm140, %v298, 0
    %305 = vmatpush.msra.mxu0 0.0
    %306 = vmatpush.msra.mxu0 0.0
    %307 = vmatpush.msra.mxu0 0.0
    %308 = vmatpush.msra.mxu0 0.0
    %309 = vmatpush.msra.mxu0 0.0
    %310 = vmatpush.msra.mxu0 0.0
    %311 = vmatpush.msra.mxu0 0.0
    %312 = vmatpush.msra.mxu0 0.0
    %313 = vmatpush.msra.mxu0 0.0
    %314 = vmatpush.msra.mxu0 0.0
    %315 = vmatpush.msra.mxu0 0.0
    %316 = vmatpush.msra.mxu0 0.0
    %317 = vmatpush.msra.mxu0 0.0
    %318 = vmatpush.msra.mxu0 0.0
    %319 = vmatpush.msra.mxu0 %v283
    %320 = vmatpush.msra.mxu0 %v280
    %321 = vmatmul.f32.gmra.mxu0 %v300
    %v322 = vpop.f32.mrf.mxu0
    %v323 = vadd.f32 0.0, %v322
    %324 = vmatmul.f32.gmra.mxu0 %v303
    %v325 = vpop.f32.mrf.mxu0
    %v326 = vadd.f32 0.0, %v325
    %327 = vdwg.mxu0
    %328 = vst [vmem:[#allocation11] sm:$0xff] %v323
    %329 = vst [vmem:[#allocation11 + $0x8] sm:$0xff] %v326
    %v330 = vld [vmem:[%s172] sm:$0xff]
    %v331 = vld [vmem:[%s172 + $0x8] sm:$0xff]
    %v333 = vsel %vm140, %v330, 0
    %v336 = vsel %vm140, %v331, 0
    %338 = vmatpush.msra.mxu0 0.0
    %339 = vmatpush.msra.mxu0 0.0
    %340 = vmatpush.msra.mxu0 0.0
    %341 = vmatpush.msra.mxu0 0.0
    %342 = vmatpush.msra.mxu0 0.0
    %343 = vmatpush.msra.mxu0 0.0
    %344 = vmatpush.msra.mxu0 0.0
    %345 = vmatpush.msra.mxu0 0.0
    %346 = vmatpush.msra.mxu0 0.0
    %347 = vmatpush.msra.mxu0 0.0
    %348 = vmatpush.msra.mxu0 0.0
    %349 = vmatpush.msra.mxu0 0.0
    %350 = vmatpush.msra.mxu0 0.0
    %351 = vmatpush.msra.mxu0 0.0
    %352 = vmatpush.msra.mxu0 %v289
    %353 = vmatpush.msra.mxu0 %v286
    %354 = vmatmul.f32.gmra.mxu0 %v333
    %v355 = vpop.f32.mrf.mxu0
    %v356 = vadd.f32 0.0, %v355
    %357 = vmatmul.f32.gmra.mxu0 %v336
    %v358 = vpop.f32.mrf.mxu0
    %v359 = vadd.f32 0.0, %v358
    %360 = vdwg.mxu0
    %361 = vst [vmem:[#allocation11 + $0x10] sm:$0xff] %v356
    %362 = vst [vmem:[#allocation11 + $0x18] sm:$0xff] %v359
    %v363 = vld [vmem:[%s206] sm:$0xff]
    %v364 = vld [vmem:[%s206 + $0x8] sm:$0xff]
    %v366 = vsel %vm140, %v363, 0
    %v369 = vsel %vm140, %v364, 0
    %371 = vmatpush.msra.mxu0 0.0
    %372 = vmatpush.msra.mxu0 0.0
    %373 = vmatpush.msra.mxu0 0.0
    %374 = vmatpush.msra.mxu0 0.0
    %375 = vmatpush.msra.mxu0 0.0
    %376 = vmatpush.msra.mxu0 0.0
    %377 = vmatpush.msra.mxu0 0.0
    %378 = vmatpush.msra.mxu0 0.0
    %379 = vmatpush.msra.mxu0 0.0
    %380 = vmatpush.msra.mxu0 0.0
    %381 = vmatpush.msra.mxu0 0.0
    %382 = vmatpush.msra.mxu0 0.0
    %383 = vmatpush.msra.mxu0 0.0
    %384 = vmatpush.msra.mxu0 0.0
    %385 = vmatpush.msra.mxu0 %v295
    %386 = vmatpush.msra.mxu0 %v292
    %387 = vmatmul.f32.gmra.mxu0 %v366
    %v388 = vpop.f32.mrf.mxu0
    %v389 = vadd.f32 0.0, %v388
    %390 = vmatmul.f32.gmra.mxu0 %v369
    %v391 = vpop.f32.mrf.mxu0
    %v392 = vadd.f32 0.0, %v391
    %393 = vdwg.mxu0
    %394 = vst [vmem:[#allocation11 + $0x20] sm:$0xff] %v389
    %395 = vst [vmem:[#allocation11 + $0x28] sm:$0xff] %v392
    // Predicated region
    $region34: #{tpu_custom_call.1} parent=1 // pred_check
      _
    $region35: #{tpu_custom_call.1} parent=1 // pred_check_branch
      %397 = sbr.rel (0) target = $region37
    $region36: #{tpu_custom_call.1} parent=1 // pred_region
      %399 = vsyncadd [#allocation5], 0
      %s400 = sshll.u32 [#allocation11], 4
      %s401 = int_to_ptr.vmem [resolvable:$true] %s400
      %s402 = sshll.u32 %s4, 4
      %s403 = int_to_ptr.hbm [resolvable:$true] %s402
      %408 = dma.vmem_to_hbm [thread:$0]  %s401, 768, %s403, [#allocation5], 128, 128, 8
    $region37: #{tpu_custom_call.1} parent=1 // pred_fallthru
      _
    // Predicated region
    $region38: #{tpu_custom_call.1} parent=1 // pred_check
      _
    $region39: #{tpu_custom_call.1} parent=1 // pred_check_branch
      %410 = sbr.rel (0) target = $region41
    $region40: #{tpu_custom_call.1} parent=1 // pred_region
      %412 = dma.done [#allocation5], 768
    $region41: #{tpu_custom_call.1} parent=1 // pred_fallthru
      _
    %413 = vsyncpa [#allocation4], 1
    %414 = vsyncpa [#allocation7], 1
    %415 = vsyncpa [#allocation10], 1
    %416 = vsyncpa [#allocation5], 1

</llo_original>
